<compile_context>
chip_gen: v7x
topology: tpu7x:2x2x1
jax: 0.10.0
libtpu: 0.0.40
codegen_flags: <defaults>
</compile_context>

<pallas_src>
import jax
import jax.numpy as jnp
from jax.experimental import pallas as pl
from jax.experimental.pallas import tpu as pltpu

_LANE = 128
_SUBLANE = 8


def _round_up(x, m):
    return ((x + m - 1) // m) * m


def _round_down(x, m):
    return (x // m) * m


def _vmem_capacity_bytes():
    """Physical VMEM of the current TPU generation (128 MiB v5e/v6e, 64 MiB v7x)."""
    try:
        cap = getattr(pltpu.get_tpu_info(), "vmem_capacity_bytes", None)
        if cap:
            return int(cap)
    except Exception:
        pass
    return 64 << 20  # conservative default (v7x per-core size)


def _linear_kernel(x_ref, w_ref, b_ref, o_ref):
    # x_ref: (TN, D), w_ref: (D, TC), b_ref: (1, TC), o_ref: (TN, TC)
    # Canonical (M,K)@(K,N) tile -> clean MXU cadence, f32 accumulation.
    acc = jnp.dot(x_ref[...], w_ref[...], preferred_element_type=jnp.float32)
    o_ref[...] = (acc + b_ref[...]).astype(o_ref.dtype)


def _pick_tile_n_resident(n, d, c_pad, x_isz, w_isz, o_isz, budget):
    """Row tile for the resident-W path, or None if W can't stay resident.

    Pallas double-buffers every input, so the grid-invariant weight and bias
    cost 2x their size in VMEM; that factor is accounted for here.  (A
    pipeline_mode=pl.Buffered(1) single-buffer request would halve it; we stay
    on the default pipeline and simply budget for the factor of 2.)
    """
    fixed = 2 * c_pad * d * w_isz + 2 * c_pad * 4            # W + bias, dbl-buffered
    per_row = 2 * d * x_isz + 2 * c_pad * o_isz              # x row + out row, dbl-buffered
    avail = budget - fixed
    if avail < per_row * _SUBLANE:
        return None
    tn = avail // per_row
    # MXU-friendly alignment: multiples of 256 (v6e/v7x systolic dim) for big
    # tiles, 128 for medium, 8-row sublane minimum otherwise.
    if tn >= 512:
        tn = _round_down(tn, 256)
    elif tn >= 128:
        tn = _round_down(tn, 128)
    else:
        tn = max(_SUBLANE, _round_down(tn, _SUBLANE))
    if n <= tn:
        if n >= 512:
            # Split into >= 2 blocks so the second TensorCore (v7x megacore,
            # "parallel" batch axis) has work; negligible cost elsewhere.
            return int(min(tn, _round_up((n + 1) // 2, _SUBLANE)))
        return int(n)            # single full-extent block (always legal)
    return int(tn)


def _pick_tiles_class_split(n, d, c_pad, x_isz, w_isz, o_isz, budget):
    """(TN, TC) for the class-tiled fallback (weight too large to stay resident)."""
    tc = _round_down(min(c_pad, 2048), _LANE)
    while tc > _LANE:
        fixed = 2 * d * tc * w_isz + 2 * tc * 4
        per_row = 2 * d * x_isz + 2 * tc * o_isz
        if fixed + _SUBLANE * per_row <= budget:
            break
        tc -= _LANE
    fixed = 2 * d * tc * w_isz + 2 * tc * 4
    per_row = 2 * d * x_isz + 2 * tc * o_isz
    avail = budget - fixed
    if avail < per_row * _SUBLANE:
        # TODO(synk): add a K-axis (num_dim) tiled accumulator path for weights
        # whose single (D, 128) column block alone exceeds the VMEM budget.
        raise ValueError("weight too large for resident or class-tiled paths")
    tn = max(_SUBLANE, _round_down(avail // per_row, _SUBLANE))
    tn = min(tn, _round_up(n, _SUBLANE))
    return int(tn), int(tc)


def prepare_linear_params(weight, bias):
    """One-time parameter prep (do at init time, NOT per forward call).

    * Transposes the PyTorch-layout (C, D) weight to (D, C_pad) so the kernel
      contracts a canonical (M,K)@(K,N) tile (no in-kernel transpose).
    * Zero-pads the class axis to a multiple of 128 so output stores are
      lane-dense; skipped when C is already 128-aligned.
    Returns (w_p, b_p, num_class).
    """
    C, D = weight.shape
    c_pad = _round_up(C, _LANE)
    if c_pad == C:
        w_p = jnp.asarray(weight).T
        b_p = jnp.asarray(bias, jnp.float32).reshape(1, C)
    else:
        w_p = jnp.zeros((D, c_pad), weight.dtype).at[:, :C].set(jnp.asarray(weight).T)
        b_p = jnp.zeros((1, c_pad), jnp.float32).at[0, :C].set(
            jnp.asarray(bias, jnp.float32))
    return w_p, b_p, C


def linear_forward(x, w_p, b_p, num_class, *, compute_dtype=None,
                   return_padded=False, _force_class_tiling=False,
                   _tile_n=None, _tile_c=None):
    """logits = x @ W^T + b using prepared (transposed / lane-padded) params.

    compute_dtype=jnp.bfloat16 halves HBM traffic for x and W (accumulation
    stays f32).  return_padded=True skips the trailing (N, C_pad)->(N, C)
    slice (padded class columns hold bias=0 logits; mask with -inf downstream
    if fed to softmax/argmax).
    """
    N, D = x.shape
    d_w, c_pad = w_p.shape
    assert d_w == D and c_pad % _LANE == 0 and num_class <= c_pad

    out_dtype = x.dtype
    if compute_dtype is not None:
        x = x.astype(compute_dtype)
        w_p = w_p.astype(compute_dtype)

    x_isz = jnp.dtype(x.dtype).itemsize
    w_isz = jnp.dtype(w_p.dtype).itemsize
    o_isz = jnp.dtype(out_dtype).itemsize

    cap = _vmem_capacity_bytes()
    budget = cap // 2                 # working-set target (counts double-buffering)
    vmem_limit = (cap * 3) // 4       # explicit scoped-VMEM limit for Mosaic

    tn = None if _force_class_tiling else _pick_tile_n_resident(
        N, D, c_pad, x_isz, w_isz, o_isz, budget)

    if tn is not None:
        # Resident-weight path: grid over batch rows only.
        if _tile_n is not None:
            tn = int(_tile_n)
        grid = (pl.cdiv(N, tn),)
        in_specs = [
            pl.BlockSpec((tn, D), lambda i: (i, 0)),       # x row tile
            pl.BlockSpec((D, c_pad), lambda i: (0, 0)),    # W resident (grid-invariant)
            pl.BlockSpec((1, c_pad), lambda i: (0, 0)),    # bias resident
        ]
        out_specs = pl.BlockSpec((tn, c_pad), lambda i: (i, 0))
        dim_sem = ("parallel",)
    else:
        # Class-tiled fallback: W split along the padded class axis.
        tn, tc = _pick_tiles_class_split(N, D, c_pad, x_isz, w_isz, o_isz, budget)
        if _tile_n is not None:
            tn = int(_tile_n)
        if _tile_c is not None:
            tc = int(_tile_c)
        grid = (pl.cdiv(N, tn), pl.cdiv(c_pad, tc))
        in_specs = [
            pl.BlockSpec((tn, D), lambda i, j: (i, 0)),
            pl.BlockSpec((D, tc), lambda i, j: (0, j)),
            pl.BlockSpec((1, tc), lambda i, j: (0, j)),
        ]
        out_specs = pl.BlockSpec((tn, tc), lambda i, j: (i, j))
        dim_sem = ("parallel", "parallel")

    out = pl.pallas_call(
        _linear_kernel,
        out_shape=jax.ShapeDtypeStruct((N, c_pad), out_dtype),
        grid_spec=pl.GridSpec(grid=grid, in_specs=in_specs, out_specs=out_specs),
        compiler_params=pltpu.CompilerParams(
            dimension_semantics=dim_sem,
            vmem_limit_bytes=int(vmem_limit)),
    )(x, w_p, b_p)

    if num_class == c_pad or return_padded:
        return out
    return out[:, :num_class]


def logistic_regression_forward(g, x, weight, bias, **kwargs):
    """Pallas equivalent of LogisticRegression.forward(g, x): logits = linear(x).

    `g` is accepted (and ignored) exactly as in the PyTorch module.  For
    repeated calls, hoist prepare_linear_params() to init time instead of
    using this convenience wrapper (it re-prepares the weight every call).
    """
    del g
    w_p, b_p, num_class = prepare_linear_params(weight, bias)
    return linear_forward(x, w_p, b_p, num_class, **kwargs)


if __name__ == "__main__":
    key = jax.random.PRNGKey(0)
    keys = jax.random.split(key, 9)

    # --- Case 1: module-sized shapes (num_dim=32, num_class=4, batch=8) -----
    num_dim, num_class, batch = 32, 4, 8
    bound = 1.0 / jnp.sqrt(num_dim)
    weight = jax.random.uniform(keys[0], (num_class, num_dim), jnp.float32, -bound, bound)
    bias = jax.random.uniform(keys[1], (num_class,), jnp.float32, -bound, bound)
    x = jax.random.normal(keys[2], (batch, num_dim), jnp.float32)

    logits = logistic_regression_forward(None, x, weight, bias)
    jax.block_until_ready(logits)
    ref = x @ weight.T + bias
    assert logits.shape == (batch, num_class)
    assert jnp.allclose(logits, ref, atol=1e-5, rtol=1e-5)

    # --- Case 2: lane-aligned class count (C % 128 == 0 -> no pad, no slice) --
    nd2, nc2, b2n = 32, 128, 8
    bd2 = 1.0 / jnp.sqrt(nd2)
    w2 = jax.random.uniform(keys[3], (nc2, nd2), jnp.float32, -bd2, bd2)
    b2 = jax.random.uniform(keys[4], (nc2,), jnp.float32, -bd2, bd2)
    x2 = jax.random.normal(keys[5], (b2n, nd2), jnp.float32)
    out2 = logistic_regression_forward(None, x2, w2, b2)
    jax.block_until_ready(out2)
    assert out2.shape == (b2n, nc2)
    assert jnp.allclose(out2, x2 @ w2.T + b2, atol=1e-5, rtol=1e-5)

    # --- Case 3: class-tiled fallback path (forced, small shapes) ------------
    nd3, nc3, b3n = 32, 300, 16
    bd3 = 1.0 / jnp.sqrt(nd3)
    w3 = jax.random.uniform(keys[6], (nc3, nd3), jnp.float32, -bd3, bd3)
    b3 = jax.random.uniform(keys[7], (nc3,), jnp.float32, -bd3, bd3)
    x3 = jax.random.normal(keys[8], (b3n, nd3), jnp.float32)
    w3_p, b3_p, c3 = prepare_linear_params(w3, b3)
    out3 = linear_forward(x3, w3_p, b3_p, c3,
                          _force_class_tiling=True, _tile_n=8, _tile_c=128)
    jax.block_until_ready(out3)
    assert out3.shape == (b3n, nc3)
    assert jnp.allclose(out3, x3 @ w3.T + b3, atol=1e-4, rtol=1e-4)

    print("KERNEL_OK")
</pallas_src>

<mosaic_0001>
module attributes {stable_mosaic.version = 11 : i64} {
  func.func @_linear_kernel(%arg0: i32, %arg1: memref<8x32xf32, #tpu.memory_space<vmem>>, %arg2: memref<32x128xf32, #tpu.memory_space<vmem>>, %arg3: memref<1x128xf32, #tpu.memory_space<vmem>>, %arg4: memref<8x128xf32, #tpu.memory_space<vmem>>) attributes {dimension_semantics = [#tpu.dimension_semantics<parallel>], iteration_bounds = array<i64: 1>, scalar_prefetch = 0 : i64, scratch_operands = 0 : i64, tpu.core_type = #tpu.core_type<tc>, window_params = [{transform_indices = @transform_0, window_bounds = array<i64: 8, 32>}, {pipeline_mode = #tpu.pipeline_mode<synchronous>, transform_indices = @transform_1, window_bounds = array<i64: 32, 128>}, {pipeline_mode = #tpu.pipeline_mode<synchronous>, transform_indices = @transform_2, window_bounds = array<i64: 1, 128>}, {transform_indices = @transform_3, window_bounds = array<i64: 8, 128>}]} {
    %c0 = arith.constant 0 : index
    %c0_0 = arith.constant 0 : index
    %0 = vector.load %arg1[%c0, %c0_0] : memref<8x32xf32, #tpu.memory_space<vmem>>, vector<8x32xf32>
    %c0_1 = arith.constant 0 : index
    %c0_2 = arith.constant 0 : index
    %1 = vector.load %arg2[%c0_1, %c0_2] : memref<32x128xf32, #tpu.memory_space<vmem>>, vector<32x128xf32>
    %cst = arith.constant dense<0.000000e+00> : vector<8x128xf32>
    %2 = tpu.matmul %0, %1, %cst {dimension_numbers = #tpu.dot_dimension_numbers<[1], [0], [0], [1], [0, 0, 1, 1], [], []>} : vector<8x32xf32>, vector<32x128xf32>, vector<8x128xf32> -> vector<8x128xf32>
    %c0_3 = arith.constant 0 : index
    %c0_4 = arith.constant 0 : index
    %3 = vector.load %arg3[%c0_3, %c0_4] : memref<1x128xf32, #tpu.memory_space<vmem>>, vector<1x128xf32>
    %4 = vector.broadcast %3 : vector<1x128xf32> to vector<8x128xf32>
    %5 = arith.addf %2, %4 : vector<8x128xf32>
    %c0_5 = arith.constant 0 : index
    %c0_6 = arith.constant 0 : index
    %6 = vector.load %arg4[%c0_5, %c0_6] : memref<8x128xf32, #tpu.memory_space<vmem>>, vector<8x128xf32>
    tpu.vector_store %arg4[%c0_5, %c0_6], %5 {strides = array<i32>} : memref<8x128xf32, #tpu.memory_space<vmem>>, vector<8x128xf32>,
    return
  }
  func.func @transform_0(%arg0: i32) -> (i32, i32) {
    %c0_i32 = arith.constant 0 : i32
    %c0_i32_0 = arith.constant 0 : i32
    return %arg0, %c0_i32 : i32, i32
  }
  func.func @transform_1(%arg0: i32) -> (i32, i32) {
    %c0_i32 = arith.constant 0 : i32
    %c0_i32_0 = arith.constant 0 : i32
    %c0_i32_1 = arith.constant 0 : i32
    return %c0_i32, %c0_i32_0 : i32, i32
  }
  func.func @transform_2(%arg0: i32) -> (i32, i32) {
    %c0_i32 = arith.constant 0 : i32
    %c0_i32_0 = arith.constant 0 : i32
    %c0_i32_1 = arith.constant 0 : i32
    return %c0_i32, %c0_i32_0 : i32, i32
  }
  func.func @transform_3(%arg0: i32) -> (i32, i32) {
    %c0_i32 = arith.constant 0 : i32
    %c0_i32_0 = arith.constant 0 : i32
    return %arg0, %c0_i32 : i32, i32
  }
}

</mosaic_0001>

<llo_original>
// kernel: tpu_custom_call.1
$region0: #{tpu_custom_call.1}
  #allocation0 [shape = 'u32[]', space=smem, size = 0x4, offset = 0x4, fixed_abs, tag = 'smem constant byte address 0x4 - core index']
  #allocation1 [shape = 'u32[144,128]{1,0:T(1,128)}', space=vmem, size = 0x12000, scoped, tag = 'internal scratch']
  %s0 = inlined_call_operand.hbm [shape: f32[8,32], index: 0, kind: input, shape index: {}]
  %s1 = inlined_call_operand.hbm [shape: f32[32,128], index: 1, kind: input, shape index: {}]
  %s2 = inlined_call_operand.vmem [shape: f32[1,128], index: 2, kind: input, shape index: {}]
  %s3 = inlined_call_operand.hbm [shape: f32[8,128], index: 3, kind: output, shape index: {}]
  %s4 = sld [smem:[#allocation0]]
  $region30: #{tpu_custom_call.1} parent=0
    _
  %s6 = ssub.s32 1, %s4
  %s7 = scalar_select 0, %s6, %s4
  $region1: #{tpu_custom_call.1} parent=0
    #allocation2 [shape = 'u8[4096]{0}', space=vmem, size = 0x1000, scoped, tag = 'input window, operand 0, single buffered']
    #allocation3 [shape = 's32[1]{0}', space=sflag, size = 0x4, scoped, tag = 'scoped memory for tpu_custom_call.1']
    #allocation4 [shape = 's32[1]{0}', space=sflag, size = 0x4, scoped, tag = 'scoped memory for tpu_custom_call.1']
    #allocation5 [shape = 'u8[16384]{0}', space=vmem, size = 0x4000, scoped, tag = 'input window, operand 1, single buffered']
    #allocation6 [shape = 's32[1]{0}', space=sflag, size = 0x4, scoped, tag = 'scoped memory for tpu_custom_call.1']
    #allocation7 [shape = 'u8[4096]{0}', space=vmem, size = 0x1000, scoped, tag = 'output window, operand 0, single buffered']
    %8 = vsyncpa [#allocation3], 0
    %9 = vsyncpa [#allocation6], 0
    %10 = vsyncpa [#allocation4], 0
    // Predicated region
    $region2: #{tpu_custom_call.1} parent=1 // pred_check
      _
    $region3: #{tpu_custom_call.1} parent=1 // pred_check_branch
      %12 = sbr.rel (0) target = $region5
    $region4: #{tpu_custom_call.1} parent=1 // pred_region
      %s14 = ssub.s32 128, 128
      %15 = vsyncadd [#allocation3], %s14
      %s17 = sshll.u32 [#allocation2], 4
      %s18 = int_to_ptr.vmem [resolvable:$true] %s17
      %20 = dma.hbm_to_vmem [thread:$0]  %s0, 128, %s18, [#allocation3]
    $region5: #{tpu_custom_call.1} parent=1 // pred_fallthru
      _
    // Predicated region
    $region6: #{tpu_custom_call.1} parent=1 // pred_check
      _
    $region7: #{tpu_custom_call.1} parent=1 // pred_check_branch
      %22 = sbr.rel (0) target = $region9
    $region8: #{tpu_custom_call.1} parent=1 // pred_region
      %s24 = ssub.s32 512, 512
      %25 = vsyncadd [#allocation6], %s24
      %s26 = sshll.u32 [#allocation5], 4
      %s27 = int_to_ptr.vmem [resolvable:$true] %s26
      %32 = dma.hbm_to_vmem [thread:$0]  %s1, 512, %s27, [#allocation6], 128, 128, 8
    $region9: #{tpu_custom_call.1} parent=1 // pred_fallthru
      _
    // Predicated region
    $region10: #{tpu_custom_call.1} parent=1 // pred_check
      _
    $region11: #{tpu_custom_call.1} parent=1 // pred_check_branch
      %34 = sbr.rel (0) target = $region13
    $region12: #{tpu_custom_call.1} parent=1 // pred_region
      _
    $region13: #{tpu_custom_call.1} parent=1 // pred_fallthru
      _
    // Predicated region
    $region14: #{tpu_custom_call.1} parent=1 // pred_check
      _
    $region15: #{tpu_custom_call.1} parent=1 // pred_check_branch
      %36 = sbr.rel (0) target = $region17
    $region16: #{tpu_custom_call.1} parent=1 // pred_region
      %37 = dma.done [#allocation3], 128
    $region17: #{tpu_custom_call.1} parent=1 // pred_fallthru
      _
    // Predicated region
    $region18: #{tpu_custom_call.1} parent=1 // pred_check
      _
    $region19: #{tpu_custom_call.1} parent=1 // pred_check_branch
      %39 = sbr.rel (0) target = $region21
    $region20: #{tpu_custom_call.1} parent=1 // pred_region
      %40 = dma.done [#allocation6], 512
    $region21: #{tpu_custom_call.1} parent=1 // pred_fallthru
      _
    %v41 = vld [vmem:[#allocation2] sm:$0xff]
    %v42 = vld [vmem:[#allocation5] sm:$0xff]
    %v43 = vld [vmem:[#allocation5 + $0x8] sm:$0xff]
    %v44 = vld [vmem:[#allocation5 + $0x10] sm:$0xff]
    %v45 = vld [vmem:[#allocation5 + $0x18] sm:$0xff]
    %v46 = vld [vmem:[%s2] sm:$0x1]
    %v48 = vlaneseq
    %v49 = vshrl.u32 %v48, 7
    %v50 = vsub.s32 0, %v49
    %v51 = vrot.slane %v46, %v50
    %vm53 = vcmask 261120
    %v55 = vsel %vm53, %v41, 0
    %57 = vmatprep.subr.mxu0 0.0
    %58 = vmatpush1.msra.mxu0 %v42
    %59 = vmatprep.subr.mxu0 0.0
    %60 = vmatpush1.msra.mxu0 %v43
    %61 = vmatprep.subr.mxu0 0.0
    %62 = vmatpush1.msra.mxu0 %v44
    %63 = vmatprep.subr.mxu0 0.0
    %64 = vmatpush1.msra.mxu0 %v45
    %65 = vmatprep.subr.mxu0 0.0
    %66 = vmatpush1.msra.mxu0 0.0
    %67 = vmatprep.subr.mxu0 0.0
    %68 = vmatpush1.msra.mxu0 0.0
    %69 = vmatprep.subr.mxu0 0.0
    %70 = vmatpush1.msra.mxu0 0.0
    %71 = vmatprep.subr.mxu0 0.0
    %72 = vmatpush1.msra.mxu0 0.0
    %73 = vmatprep.subr.mxu0 0.0
    %74 = vmatpush1.msra.mxu0 0.0
    %75 = vmatprep.subr.mxu0 0.0
    %76 = vmatpush1.msra.mxu0 0.0
    %77 = vmatprep.subr.mxu0 0.0
    %78 = vmatpush1.msra.mxu0 0.0
    %79 = vmatprep.subr.mxu0 0.0
    %80 = vmatpush1.msra.mxu0 0.0
    %81 = vmatprep.subr.mxu0 0.0
    %82 = vmatpush1.msra.mxu0 0.0
    %83 = vmatprep.subr.mxu0 0.0
    %84 = vmatpush1.msra.mxu0 0.0
    %85 = vmatprep.subr.mxu0 0.0
    %86 = vmatpush1.msra.mxu0 0.0
    %87 = vmatprep.subr.mxu0 0.0
    %88 = vmatpush1.msra.mxu0 0.0
    %89 = vmatprep.subr.mxu0 0.0
    %90 = vmatpush1.msra.mxu0 0.0
    %91 = vmatprep.subr.mxu0 0.0
    %92 = vmatpush1.msra.mxu0 0.0
    %93 = vmatprep.subr.mxu0 0.0
    %94 = vmatpush1.msra.mxu0 0.0
    %95 = vmatprep.subr.mxu0 0.0
    %96 = vmatpush1.msra.mxu0 0.0
    %97 = vmatprep.subr.mxu0 0.0
    %98 = vmatpush1.msra.mxu0 0.0
    %99 = vmatprep.subr.mxu0 0.0
    %100 = vmatpush1.msra.mxu0 0.0
    %101 = vmatprep.subr.mxu0 0.0
    %102 = vmatpush1.msra.mxu0 0.0
    %103 = vmatprep.subr.mxu0 0.0
    %104 = vmatpush1.msra.mxu0 0.0
    %105 = vmatprep.subr.mxu0 0.0
    %106 = vmatpush1.msra.mxu0 0.0
    %107 = vmatprep.subr.mxu0 0.0
    %108 = vmatpush1.msra.mxu0 0.0
    %109 = vmatprep.subr.mxu0 0.0
    %110 = vmatpush1.msra.mxu0 0.0
    %111 = vmatprep.subr.mxu0 0.0
    %112 = vmatpush1.msra.mxu0 0.0
    %113 = vmatprep.subr.mxu0 0.0
    %114 = vmatpush1.msra.mxu0 0.0
    %115 = vmatprep.subr.mxu0 0.0
    %116 = vmatpush1.msra.mxu0 0.0
    %117 = vmatprep.subr.mxu0 0.0
    %118 = vmatpush1.msra.mxu0 0.0
    %119 = vmatprep.subr.mxu0 0.0
    %120 = vmatpush1.msra.mxu0 0.0
    %121 = vmatprep.mubr.f32.mxu0 0.0
    %122 = vmatmul.mubr.f32.gmra.mrb[0].mxu0 %v55
    %v123 = vpop.f32.mrb[0].mxu0
    %v124 = vadd.f32 %v51, %v123
    %v125 = vpop.f32.mrb[0].mxu0
    %126 = vdwg.mxu0
    %127 = vst [vmem:[#allocation7] sm:$0xff] %v124
    // Predicated region
    $region22: #{tpu_custom_call.1} parent=1 // pred_check
      _
    $region23: #{tpu_custom_call.1} parent=1 // pred_check_branch
      %129 = sbr.rel (0) target = $region25
    $region24: #{tpu_custom_call.1} parent=1 // pred_region
      %s131 = ssub.s32 128, 128
      %132 = vsyncadd [#allocation4], %s131
      %s134 = sshll.u32 [#allocation7], 4
      %s135 = int_to_ptr.vmem [resolvable:$true] %s134
      %137 = dma.vmem_to_hbm [thread:$0]  %s135, 128, %s3, [#allocation4]
    $region25: #{tpu_custom_call.1} parent=1 // pred_fallthru
      _
    // Predicated region
    $region26: #{tpu_custom_call.1} parent=1 // pred_check
      _
    $region27: #{tpu_custom_call.1} parent=1 // pred_check_branch
      %139 = sbr.rel (0) target = $region29
    $region28: #{tpu_custom_call.1} parent=1 // pred_region
      %140 = dma.done [#allocation4], 128
    $region29: #{tpu_custom_call.1} parent=1 // pred_fallthru
      _
    %141 = vsyncpa [#allocation3], 1
    %142 = vsyncpa [#allocation6], 1
    %143 = vsyncpa [#allocation4], 1

</llo_original>
